<compile_context>
chip_gen: v7x
topology: tpu7x:2x2x1
jax: 0.10.0
libtpu: 0.0.40
codegen_flags: <defaults>
</compile_context>

<pallas_src>
import functools
import math

import jax
import jax.numpy as jnp
from jax.experimental import pallas as pl
from jax.experimental.pallas import tpu as pltpu


# ----------------------------------------------------------------------------
# Tiling helpers (byte-budgeted, cdiv-based)
# ----------------------------------------------------------------------------
_TARGET_BLOCK_BYTES = 2 * 1024 * 1024     # ~2 MiB per pipelined input block
_VMEM_LIMIT_BYTES = 32 * 1024 * 1024      # explicit scoped-VMEM budget (safe on
                                          # v5e/v6e/v7x; ~4 blocks + params fit)


def _cdiv(a, b):
    return -(-a // b)


def _spatial_tile(S, C, itemsize, n_batch):
    """Lane (spatial) tile for the channels_first kernel (multiple of 128)."""
    per_lane = max(1, C * itemsize)
    t = (_TARGET_BLOCK_BYTES // per_lane // 128) * 128
    t = max(128, t)
    if t >= S:
        t = S                                 # full-extent block: always legal
        if n_batch == 1 and S > 128:
            # Keep >= 2 grid blocks so both v7x TensorCores have work.
            t = 128 * _cdiv(_cdiv(S, 2), 128)
            if t >= S:
                t = S
    return t


def _row_tile(Np, L, itemsize):
    """Row tile for the channels_last kernel (multiple of 16: f32+bf16 safe)."""
    per_row = max(1, L * itemsize)
    t = (_TARGET_BLOCK_BYTES // per_row // 16) * 16
    t = max(16, t)
    if t >= Np:
        t = Np
        if Np > 16:
            t = 16 * _cdiv(_cdiv(Np, 2), 16)  # >= 2 blocks for megacore
            if t >= Np:
                t = Np
    return t


# ----------------------------------------------------------------------------
# Kernels
# ----------------------------------------------------------------------------
def _ln2d_channels_first_kernel(x_ref, w_ref, b_ref, o_ref, *, eps):
    """x block (1, C, S_tile): normalize over C (sublane axis) per spatial lane."""
    x = x_ref[0].astype(jnp.float32)                       # (C, S_t) f32 math
    inv_c = 1.0 / x.shape[0]
    u = jnp.sum(x, axis=0, keepdims=True) * inv_c          # mean       (1, S_t)
    s2 = jnp.sum(x * x, axis=0, keepdims=True) * inv_c     # E[x^2]
    var = jnp.maximum(s2 - u * u, 0.0)                     # single-pass variance
    inv = jax.lax.rsqrt(var + eps)                         # EUP rsqrt, no divide
    w = w_ref[...].astype(jnp.float32)                     # (C, 1)
    b = b_ref[...].astype(jnp.float32)
    o_ref[0] = ((x - u) * inv * w + b).astype(o_ref.dtype)


def _ln2d_channels_last_kernel(x_ref, w_ref, b_ref, o_ref, *, eps):
    """x block (R_tile, C): standard layer_norm over the last (lane) axis."""
    x = x_ref[...].astype(jnp.float32)                     # (r, C)
    inv_c = 1.0 / x.shape[-1]
    u = jnp.sum(x, axis=-1, keepdims=True) * inv_c
    s2 = jnp.sum(x * x, axis=-1, keepdims=True) * inv_c
    var = jnp.maximum(s2 - u * u, 0.0)
    xn = (x - u) * jax.lax.rsqrt(var + eps)
    o_ref[...] = (xn * w_ref[...].astype(jnp.float32)
                  + b_ref[...].astype(jnp.float32)).astype(o_ref.dtype)


def _ln2d_channels_last_packed_kernel(x_ref, m_ref, w_ref, b_ref, o_ref, *,
                                      eps, channels):
    """Lane-packed channels_last: x block (R_tile, L) with L = k*C (128-dense).

    Per-pixel channel sums are computed with one MXU matmul against a 0/1
    block-diagonal group mask (L, L); the matmul both reduces within each group
    of C lanes and broadcasts the sum back to those lanes.  The mask is exact in
    bf16, so Precision.HIGHEST recovers full f32 accuracy for the statistics.
    """
    x = x_ref[...].astype(jnp.float32)                     # (r, L)
    m = m_ref[...]                                         # (L, L) 0/1 mask
    inv_c = 1.0 / channels
    s1 = jnp.dot(x, m, precision=jax.lax.Precision.HIGHEST,
                 preferred_element_type=jnp.float32) * inv_c
    s2 = jnp.dot(x * x, m, precision=jax.lax.Precision.HIGHEST,
                 preferred_element_type=jnp.float32) * inv_c
    var = jnp.maximum(s2 - s1 * s1, 0.0)
    xn = (x - s1) * jax.lax.rsqrt(var + eps)
    o_ref[...] = (xn * w_ref[...].astype(jnp.float32)
                  + b_ref[...].astype(jnp.float32)).astype(o_ref.dtype)


# ----------------------------------------------------------------------------
# Wrappers
# ----------------------------------------------------------------------------
def layernorm2d_channels_first(x, weight, bias, *, eps=1e-6):
    """x: (B, C, H, W) -- normalize over C per (b, h, w).  dtype passes through."""
    B, C, H, W = x.shape
    S = H * W
    x_flat = x.reshape(B, C, S)                 # free view: S is the lane dim
    itemsize = jnp.dtype(x.dtype).itemsize
    s_tile = _spatial_tile(S, C, itemsize, B)
    grid = (B, _cdiv(S, s_tile))                # ragged last block is masked

    kernel = functools.partial(_ln2d_channels_first_kernel, eps=eps)
    out = pl.pallas_call(
        kernel,
        out_shape=jax.ShapeDtypeStruct((B, C, S), x.dtype),
        grid_spec=pltpu.PrefetchScalarGridSpec(
            num_scalar_prefetch=0,
            grid=grid,
            in_specs=[
                pl.BlockSpec((1, C, s_tile), lambda b, s: (b, 0, s)),   # x
                pl.BlockSpec((C, 1), lambda b, s: (0, 0)),              # weight
                pl.BlockSpec((C, 1), lambda b, s: (0, 0)),              # bias
            ],
            out_specs=pl.BlockSpec((1, C, s_tile), lambda b, s: (b, 0, s)),
        ),
        compiler_params=pltpu.CompilerParams(
            dimension_semantics=("parallel", "parallel"),
            vmem_limit_bytes=_VMEM_LIMIT_BYTES),
    )(x_flat,
      weight.astype(jnp.float32).reshape(C, 1),
      bias.astype(jnp.float32).reshape(C, 1))

    return out.reshape(B, C, H, W)


def layernorm2d_channels_last(x, weight, bias, *, eps=1e-6):
    """x: (B, H, W, C) -- F.layer_norm over the last dim C.  dtype passes through."""
    B, H, W, C = x.shape
    N = B * H * W
    itemsize = jnp.dtype(x.dtype).itemsize
    w32 = weight.astype(jnp.float32)
    b32 = bias.astype(jnp.float32)

    # Lane packing: fold k pixels into one lane-dense row of width L = k*C
    # (a pure row-major view) whenever C is not already 128-lane dense and the
    # pixel count divides evenly.  Keeps HBM stores unmasked/full-lane.
    k = 1
    if C % 128 != 0:
        k_cand = 128 // math.gcd(C, 128)
        if k_cand > 1 and N % k_cand == 0 and k_cand * C <= 512:
            k = k_cand
    Np, L = N // k, k * C
    x2 = x.reshape(Np, L)
    r_tile = _row_tile(Np, L, itemsize)
    grid = (_cdiv(Np, r_tile),)                 # ragged last block is masked
    cparams = pltpu.CompilerParams(dimension_semantics=("parallel",),
                                   vmem_limit_bytes=_VMEM_LIMIT_BYTES)

    if k == 1:
        kernel = functools.partial(_ln2d_channels_last_kernel, eps=eps)
        out = pl.pallas_call(
            kernel,
            out_shape=jax.ShapeDtypeStruct((Np, L), x.dtype),
            grid_spec=pltpu.PrefetchScalarGridSpec(
                num_scalar_prefetch=0,
                grid=grid,
                in_specs=[
                    pl.BlockSpec((r_tile, L), lambda i: (i, 0)),        # x
                    pl.BlockSpec((1, L), lambda i: (0, 0)),             # weight
                    pl.BlockSpec((1, L), lambda i: (0, 0)),             # bias
                ],
                out_specs=pl.BlockSpec((r_tile, L), lambda i: (i, 0)),
            ),
            compiler_params=cparams,
        )(x2, w32.reshape(1, L), b32.reshape(1, L))
    else:
        gid = jnp.arange(L, dtype=jnp.int32) // C
        gmask = (gid[:, None] == gid[None, :]).astype(jnp.float32)      # (L, L)
        w_tiled = jnp.tile(w32, k).reshape(1, L)
        b_tiled = jnp.tile(b32, k).reshape(1, L)
        kernel = functools.partial(_ln2d_channels_last_packed_kernel,
                                   eps=eps, channels=C)
        out = pl.pallas_call(
            kernel,
            out_shape=jax.ShapeDtypeStruct((Np, L), x.dtype),
            grid_spec=pltpu.PrefetchScalarGridSpec(
                num_scalar_prefetch=0,
                grid=grid,
                in_specs=[
                    pl.BlockSpec((r_tile, L), lambda i: (i, 0)),        # x
                    pl.BlockSpec((L, L), lambda i: (0, 0)),             # group mask
                    pl.BlockSpec((1, L), lambda i: (0, 0)),             # weight
                    pl.BlockSpec((1, L), lambda i: (0, 0)),             # bias
                ],
                out_specs=pl.BlockSpec((r_tile, L), lambda i: (i, 0)),
            ),
            compiler_params=cparams,
        )(x2, gmask, w_tiled, b_tiled)

    return out.reshape(B, H, W, C)


# ----------------------------------------------------------------------------
# Pure-JAX references (mirror the PyTorch forward)
# ----------------------------------------------------------------------------
def _ref_channels_first(x, weight, bias, eps=1e-6):
    x = x.astype(jnp.float32)
    u = jnp.mean(x, axis=1, keepdims=True)
    s = jnp.mean((x - u) ** 2, axis=1, keepdims=True)
    xn = (x - u) / jnp.sqrt(s + eps)
    return weight[None, :, None, None] * xn + bias[None, :, None, None]


def _ref_channels_last(x, weight, bias, eps=1e-6):
    x = x.astype(jnp.float32)
    u = jnp.mean(x, axis=-1, keepdims=True)
    s = jnp.mean((x - u) ** 2, axis=-1, keepdims=True)
    xn = (x - u) / jnp.sqrt(s + eps)
    return xn * weight + bias


def _check(out, ref, atol, rtol, tag):
    out = jnp.asarray(out, jnp.float32)
    assert out.shape == ref.shape, (tag, out.shape, ref.shape)
    ok = jnp.allclose(out, ref, atol=atol, rtol=rtol)
    assert bool(ok), (tag, float(jnp.max(jnp.abs(out - ref))))


# ----------------------------------------------------------------------------
# Test
# ----------------------------------------------------------------------------
if __name__ == "__main__":
    eps = 1e-6
    key = jax.random.PRNGKey(0)
    k1, k2, k3, k4, k5, k6, k7, k8 = jax.random.split(key, 8)

    # --- channels_first, f32: (B, C, H, W) ---
    B, C, H, W = 2, 32, 16, 16
    w = 1.0 + 0.1 * jax.random.normal(k3, (C,), jnp.float32)
    b = 0.1 * jax.random.normal(k4, (C,), jnp.float32)
    x_cf = jax.random.normal(k1, (B, C, H, W), jnp.float32)
    out = jax.block_until_ready(layernorm2d_channels_first(x_cf, w, b, eps=eps))
    _check(out, _ref_channels_first(x_cf, w, b, eps), 1e-5, 1e-5, "cf_f32")

    # --- channels_last, f32 (exercises lane packing, C=32 -> k=4): (B, H, W, C) ---
    x_cl = jax.random.normal(k2, (B, H, W, C), jnp.float32)
    out = jax.block_until_ready(layernorm2d_channels_last(x_cl, w, b, eps=eps))
    _check(out, _ref_channels_last(x_cl, w, b, eps), 1e-5, 1e-5, "cl_f32_packed")

    # --- bf16 I/O, both formats (f32 stats inside the kernel) ---
    x_cf_bf = x_cf.astype(jnp.bfloat16)
    out = jax.block_until_ready(layernorm2d_channels_first(x_cf_bf, w, b, eps=eps))
    _check(out, _ref_channels_first(x_cf_bf, w, b, eps), 5e-2, 5e-2, "cf_bf16")
    x_cl_bf = x_cl.astype(jnp.bfloat16)
    out = jax.block_until_ready(layernorm2d_channels_last(x_cl_bf, w, b, eps=eps))
    _check(out, _ref_channels_last(x_cl_bf, w, b, eps), 5e-2, 5e-2, "cl_bf16_packed")

    # --- channels_first, ragged spatial + forced megacore split (B=1, S=300) ---
    C2 = 16
    w2 = 1.0 + 0.1 * jax.random.normal(k7, (C2,), jnp.float32)
    b2 = 0.1 * jax.random.normal(k8, (C2,), jnp.float32)
    x_r = jax.random.normal(k5, (1, C2, 15, 20), jnp.float32)
    out = jax.block_until_ready(layernorm2d_channels_first(x_r, w2, b2, eps=eps))
    _check(out, _ref_channels_first(x_r, w2, b2, eps), 1e-5, 1e-5, "cf_ragged")

    # --- channels_last, packing fallback (C=48, N=25) + ragged row blocks ---
    C3 = 48
    w3 = jnp.ones((C3,), jnp.float32)
    b3 = jnp.zeros((C3,), jnp.float32)
    x_f = jax.random.normal(k6, (1, 5, 5, C3), jnp.float32)
    out = jax.block_until_ready(layernorm2d_channels_last(x_f, w3, b3, eps=eps))
    _check(out, _ref_channels_last(x_f, w3, b3, eps), 1e-5, 1e-5, "cl_fallback")

    print("KERNEL_OK")
</pallas_src>

<mosaic_0001>
module attributes {stable_mosaic.version = 11 : i64} {
  func.func @_ln2d_channels_first_kernel(%arg0: i32, %arg1: i32, %arg2: memref<1x32x256xf32, #tpu.memory_space<vmem>>, %arg3: memref<32x1xf32, #tpu.memory_space<vmem>>, %arg4: memref<32x1xf32, #tpu.memory_space<vmem>>, %arg5: memref<1x32x256xf32, #tpu.memory_space<vmem>>) attributes {dimension_semantics = [#tpu.dimension_semantics<parallel>, #tpu.dimension_semantics<parallel>], iteration_bounds = array<i64: 2, 1>, scalar_prefetch = 0 : i64, scratch_operands = 0 : i64, tpu.core_type = #tpu.core_type<tc>, window_params = [{transform_indices = @transform_0, window_bounds = array<i64: 1, 32, 256>}, {pipeline_mode = #tpu.pipeline_mode<synchronous>, transform_indices = @transform_1, window_bounds = array<i64: 32, 1>}, {pipeline_mode = #tpu.pipeline_mode<synchronous>, transform_indices = @transform_2, window_bounds = array<i64: 32, 1>}, {transform_indices = @transform_3, window_bounds = array<i64: 1, 32, 256>}]} {
    %c0 = arith.constant 0 : index
    %c0_0 = arith.constant 0 : index
    %c0_1 = arith.constant 0 : index
    %0 = vector.load %arg2[%c0, %c0_0, %c0_1] : memref<1x32x256xf32, #tpu.memory_space<vmem>>, vector<1x32x256xf32>
    %1 = vector.shape_cast %0 : vector<1x32x256xf32> to vector<32x256xf32>
    %cst = arith.constant dense<0.000000e+00> : vector<256xf32>
    %2 = vector.multi_reduction <add>, %1, %cst [0] : vector<32x256xf32> to vector<256xf32>
    %3 = vector.shape_cast %2 : vector<256xf32> to vector<1x256xf32>
    %cst_2 = arith.constant 3.125000e-02 : f32
    %4 = vector.broadcast %cst_2 : f32 to vector<1x256xf32>
    %5 = arith.mulf %3, %4 : vector<1x256xf32>
    %6 = arith.mulf %1, %1 : vector<32x256xf32>
    %cst_3 = arith.constant dense<0.000000e+00> : vector<256xf32>
    %7 = vector.multi_reduction <add>, %6, %cst_3 [0] : vector<32x256xf32> to vector<256xf32>
    %8 = vector.shape_cast %7 : vector<256xf32> to vector<1x256xf32>
    %cst_4 = arith.constant 3.125000e-02 : f32
    %9 = vector.broadcast %cst_4 : f32 to vector<1x256xf32>
    %10 = arith.mulf %8, %9 : vector<1x256xf32>
    %11 = arith.mulf %5, %5 : vector<1x256xf32>
    %12 = arith.subf %10, %11 : vector<1x256xf32>
    %cst_5 = arith.constant 0.000000e+00 : f32
    %13 = vector.broadcast %cst_5 : f32 to vector<1x256xf32>
    %14 = arith.maximumf %12, %13 : vector<1x256xf32>
    %cst_6 = arith.constant 9.99999997E-7 : f32
    %15 = vector.broadcast %cst_6 : f32 to vector<1x256xf32>
    %16 = arith.addf %14, %15 : vector<1x256xf32>
    %17 = math.rsqrt %16 : vector<1x256xf32>
    %c0_7 = arith.constant 0 : index
    %c0_8 = arith.constant 0 : index
    %18 = vector.load %arg3[%c0_7, %c0_8] : memref<32x1xf32, #tpu.memory_space<vmem>>, vector<32x1xf32>
    %c0_9 = arith.constant 0 : index
    %c0_10 = arith.constant 0 : index
    %19 = vector.load %arg4[%c0_9, %c0_10] : memref<32x1xf32, #tpu.memory_space<vmem>>, vector<32x1xf32>
    %20 = vector.broadcast %5 : vector<1x256xf32> to vector<32x256xf32>
    %21 = arith.subf %1, %20 : vector<32x256xf32>
    %22 = vector.broadcast %17 : vector<1x256xf32> to vector<32x256xf32>
    %23 = arith.mulf %21, %22 : vector<32x256xf32>
    %24 = vector.broadcast %18 : vector<32x1xf32> to vector<32x256xf32>
    %25 = arith.mulf %23, %24 : vector<32x256xf32>
    %26 = vector.broadcast %19 : vector<32x1xf32> to vector<32x256xf32>
    %27 = arith.addf %25, %26 : vector<32x256xf32>
    %c0_11 = arith.constant 0 : index
    %c0_12 = arith.constant 0 : index
    %c0_13 = arith.constant 0 : index
    %28 = vector.load %arg5[%c0_11, %c0_12, %c0_13] : memref<1x32x256xf32, #tpu.memory_space<vmem>>, vector<1x32x256xf32>
    %29 = vector.shape_cast %28 : vector<1x32x256xf32> to vector<32x256xf32>
    %30 = vector.shape_cast %27 : vector<32x256xf32> to vector<1x32x256xf32>
    tpu.vector_store %arg5[%c0_11, %c0_12, %c0_13], %30 {strides = array<i32>} : memref<1x32x256xf32, #tpu.memory_space<vmem>>, vector<1x32x256xf32>,
    return
  }
  func.func @transform_0(%arg0: i32, %arg1: i32) -> (i32, i32, i32) {
    %c0_i32 = arith.constant 0 : i32
    %c0_i32_0 = arith.constant 0 : i32
    return %arg0, %c0_i32, %arg1 : i32, i32, i32
  }
  func.func @transform_1(%arg0: i32, %arg1: i32) -> (i32, i32) {
    %c0_i32 = arith.constant 0 : i32
    %c0_i32_0 = arith.constant 0 : i32
    %c0_i32_1 = arith.constant 0 : i32
    return %c0_i32, %c0_i32_0 : i32, i32
  }
  func.func @transform_2(%arg0: i32, %arg1: i32) -> (i32, i32) {
    %c0_i32 = arith.constant 0 : i32
    %c0_i32_0 = arith.constant 0 : i32
    %c0_i32_1 = arith.constant 0 : i32
    return %c0_i32, %c0_i32_0 : i32, i32
  }
  func.func @transform_3(%arg0: i32, %arg1: i32) -> (i32, i32, i32) {
    %c0_i32 = arith.constant 0 : i32
    %c0_i32_0 = arith.constant 0 : i32
    return %arg0, %c0_i32, %arg1 : i32, i32, i32
  }
}

</mosaic_0001>

<llo_original>
// kernel: tpu_custom_call.1
$region0: #{tpu_custom_call.1}
  #allocation0 [shape = 'u32[]', space=smem, size = 0x4, offset = 0x4, fixed_abs, tag = 'smem constant byte address 0x4 - core index']
  #allocation1 [shape = 'u32[144,128]{1,0:T(1,128)}', space=vmem, size = 0x12000, scoped, tag = 'internal scratch']
  %s0 = inlined_call_operand.hbm [shape: f32[2,32,256], index: 0, kind: input, shape index: {}]
  %s1 = inlined_call_operand.vmem [shape: f32[32,1], index: 1, kind: input, shape index: {}]
  %s2 = inlined_call_operand.vmem [shape: f32[32,1], index: 2, kind: input, shape index: {}]
  %s3 = inlined_call_operand.hbm [shape: f32[2,32,256], index: 3, kind: output, shape index: {}]
  %s4 = sld [smem:[#allocation0]]
  $region49: #{tpu_custom_call.1} parent=0
    _
  %s6 = ssub.s32 1, %s4
  %s7 = scalar_select 0, %s6, %s4
  $region1: #{tpu_custom_call.1} parent=0
    #allocation2 [shape = 'u8[65536]{0}', space=vmem, size = 0x10000, scoped, tag = 'input window, operand 0']
    #allocation3 [shape = 's32[2]{0}', space=sflag, size = 0x8, scoped, tag = 'scoped memory for tpu_custom_call.1']
    #allocation4 [shape = 's32[2]{0}', space=sflag, size = 0x8, scoped, tag = 'scoped memory for tpu_custom_call.1']
    #allocation5 [shape = 'u8[65536]{0}', space=vmem, size = 0x10000, scoped, tag = 'output window, operand 0']
    %8 = vsyncpa [#allocation3], 0
    %s9 = scalar_lea.sflag [#allocation3], 1
    %10 = vsyncpa %s9, 0
    %11 = vsyncpa [#allocation4], 0
    %s12 = scalar_lea.sflag [#allocation4], 1
    %13 = vsyncpa %s12, 0
    loop: start=0, step=1, limit=4
    $region2: #{tpu_custom_call.1} parent=1 // loop_pre_header
      _
    $region3: #{tpu_custom_call.1} parent=1 // loop_header
      %s15 = sphi 0, %s19
      %p16 = scmp.ge.s32.totalorder %s15, 4
      %s22 = sphi 0, %s34
      %s23 = sphi 0, %s30
      %s24 = sphi 0, %s22
      %s25 = sphi 0, %s23
      %s26 = sphi 0, %s24
      %s27 = sphi 0, %s25
      %s39 = sphi 0, %s41
      %s42 = sphi 0, %s39
      %s43 = sphi 0, %s42
      %s59 = sphi 0, %s43
      %s63 = sphi 0, %s63
      %s65 = sphi 0, %s63
      %s66 = sphi 0, %s65
      %s80 = sphi 0, %s66
      %s84 = sphi 0, %s84
      %s86 = sphi 0, %s84
      %s87 = sphi 0, %s86
      %s101 = sphi 0, %s87
      %s109 = sphi 0, %s111
      %s112 = sphi 0, %s109
      %s113 = sphi 0, %s112
      %s129 = sphi 0, %s113
    $region4: #{tpu_custom_call.1} parent=1 // loop_header_branch
      %18 = sbr.rel (%p16) target = $region8
    $region5: #{tpu_custom_call.1} parent=1 // loop_body
      %s20 = ssub.s32 %s15, 1
      %s21 = ssub.s32 %s15, 2
      %s28 = sadd.s32 1, %s23
      %p29 = scmp.ge.s32.totalorder %s28, 1
      %s30 = scalar_select %p29, 0, %s28
      %s31 = sadd.s32 1, %s22
      %s32 = scalar_select %p29, %s31, %s22
      %p33 = scmp.ge.s32.totalorder %s32, 2
      %s34 = scalar_select %p33, 0, %s32
      %s35 = ssub.s32 %s22, %s34
      %s36 = ssub.s32 %s23, %s30
      %s37 = sor.u32 %s35, %s36
      %p38 = scmp.eq.s32.totalorder %s37, 0
      %s40 = sadd.s32 %s39, 1
      %s41 = scalar_select %p38, %s39, %s40
      %p44 = pneg %p38
      %p45 = scmp.eq.s32.totalorder %s15, 1
      %p46 = por %p44, %p45
      %p47 = scmp.ne.s32.totalorder %s39, %s42
      %p48 = scmp.eq.s32.totalorder %s15, 0
      %p49 = por %p47, %p48
      %p50 = scmp.ne.s32.totalorder %s39, %s42
      %p51 = scmp.eq.s32.totalorder %s20, 1
      %p52 = por %p50, %p51
      %p53 = scmp.ne.s32.totalorder %s42, %s43
      %p54 = scmp.eq.s32.totalorder %s20, 0
      %p55 = por %p53, %p54
      %p56 = scmp.ne.s32.totalorder %s42, %s43
      %p57 = scmp.eq.s32.totalorder %s21, 1
      %p58 = por %p56, %p57
      %p60 = scmp.ne.s32.totalorder %s43, %s59
      %p61 = scmp.eq.s32.totalorder %s21, 0
      %p62 = por %p60, %p61
      %s64 = sadd.s32 %s63, 1
      %p67 = scmp.eq.s32.totalorder %s15, 1
      %p68 = scmp.ne.s32.totalorder %s63, %s65
      %p69 = scmp.eq.s32.totalorder %s15, 0
      %p70 = por %p68, %p69
      %p71 = scmp.ne.s32.totalorder %s63, %s65
      %p72 = scmp.eq.s32.totalorder %s20, 1
      %p73 = por %p71, %p72
      %p74 = scmp.ne.s32.totalorder %s65, %s66
      %p75 = scmp.eq.s32.totalorder %s20, 0
      %p76 = por %p74, %p75
      %p77 = scmp.ne.s32.totalorder %s65, %s66
      %p78 = scmp.eq.s32.totalorder %s21, 1
      %p79 = por %p77, %p78
      %p81 = scmp.ne.s32.totalorder %s66, %s80
      %p82 = scmp.eq.s32.totalorder %s21, 0
      %p83 = por %p81, %p82
      %s85 = sadd.s32 %s84, 1
      %p88 = scmp.eq.s32.totalorder %s15, 1
      %p89 = scmp.ne.s32.totalorder %s84, %s86
      %p90 = scmp.eq.s32.totalorder %s15, 0
      %p91 = por %p89, %p90
      %p92 = scmp.ne.s32.totalorder %s84, %s86
      %p93 = scmp.eq.s32.totalorder %s20, 1
      %p94 = por %p92, %p93
      %p95 = scmp.ne.s32.totalorder %s86, %s87
      %p96 = scmp.eq.s32.totalorder %s20, 0
      %p97 = por %p95, %p96
      %p98 = scmp.ne.s32.totalorder %s86, %s87
      %p99 = scmp.eq.s32.totalorder %s21, 1
      %p100 = por %p98, %p99
      %p102 = scmp.ne.s32.totalorder %s87, %s101
      %p103 = scmp.eq.s32.totalorder %s21, 0
      %p104 = por %p102, %p103
      %s105 = ssub.s32 %s22, %s34
      %s106 = ssub.s32 %s23, %s30
      %s107 = sor.u32 %s105, %s106
      %p108 = scmp.eq.s32.totalorder %s107, 0
      %s110 = sadd.s32 %s109, 1
      %s111 = scalar_select %p108, %s109, %s110
      %p114 = pneg %p108
      %p115 = scmp.eq.s32.totalorder %s15, 1
      %p116 = por %p114, %p115
      %p117 = scmp.ne.s32.totalorder %s109, %s112
      %p118 = scmp.eq.s32.totalorder %s15, 0
      %p119 = por %p117, %p118
      %p120 = scmp.ne.s32.totalorder %s109, %s112
      %p121 = scmp.eq.s32.totalorder %s20, 1
      %p122 = por %p120, %p121
      %p123 = scmp.ne.s32.totalorder %s112, %s113
      %p124 = scmp.eq.s32.totalorder %s20, 0
      %p125 = por %p123, %p124
      %p126 = scmp.ne.s32.totalorder %s112, %s113
      %p127 = scmp.eq.s32.totalorder %s21, 1
      %p128 = por %p126, %p127
      %p130 = scmp.ne.s32.totalorder %s113, %s129
      %p131 = scmp.eq.s32.totalorder %s21, 0
      %p132 = por %p130, %p131
      %p133 = scmp.le.s32.totalorder 1, %s15
      %p134 = scmp.lt.s32.totalorder %s15, 3
      %p135 = pnand %p133, %p134
      %p136 = pneg %p135
      // Predicated region
      $region9: #{tpu_custom_call.1} parent=5 // pred_check
        _
      $region10: #{tpu_custom_call.1} parent=5 // pred_check_branch
        %138 = sbr.rel (%p135) target = $region12
      $region11: #{tpu_custom_call.1} parent=5 // pred_region
        %s139 = ssub.s32 %s15, 1
        // Predicated region
        $region13: #{tpu_custom_call.1} parent=11 // pred_check
          %p140 = pneg %p76
        $region14: #{tpu_custom_call.1} parent=11 // pred_check_branch
          %142 = sbr.rel (%p140) target = $region16
        $region15: #{tpu_custom_call.1} parent=11 // pred_region
          _
        $region16: #{tpu_custom_call.1} parent=11 // pred_fallthru
          _
        // Predicated region
        $region17: #{tpu_custom_call.1} parent=11 // pred_check
          %p143 = pneg %p97
        $region18: #{tpu_custom_call.1} parent=11 // pred_check_branch
          %145 = sbr.rel (%p143) target = $region20
        $region19: #{tpu_custom_call.1} parent=11 // pred_region
          _
        $region20: #{tpu_custom_call.1} parent=11 // pred_fallthru
          _
      $region12: #{tpu_custom_call.1} parent=5 // pred_fallthru
        _
      %p146 = scmp.lt.s32.totalorder %s15, 2
      // Predicated region
      $region21: #{tpu_custom_call.1} parent=5 // pred_check
        %p147 = pneg %p146
      $region22: #{tpu_custom_call.1} parent=5 // pred_check_branch
        %149 = sbr.rel (%p147) target = $region24
      $region23: #{tpu_custom_call.1} parent=5 // pred_region
        // Predicated region
        $region25: #{tpu_custom_call.1} parent=23 // pred_check
          %p150 = pneg %p49
        $region26: #{tpu_custom_call.1} parent=23 // pred_check_branch
          %152 = sbr.rel (%p150) target = $region28
        $region27: #{tpu_custom_call.1} parent=23 // pred_region
          %s153 = sand.u32 %s39, 1
          %s154 = scalar_lea.sflag [#allocation3], %s153
          %s155 = sand.u32 %s39, 1
          %s156 = smul.addr %s155, 64
          %s157 = scalar_lea.vmem [#allocation2], %s156
          %s158 = smul.u32 2, %s23
          %s160 = ssub.s32 1024, 1024
          %161 = vsyncadd %s154, %s160
          %s162 = smul.addr %s22, 8
          %s163 = sadd.s32 %s158, %s162
          %s164 = smul.addr %s163, 128
          %s165 = scalar_lea.hbm %s0, %s164
          %s166 = sshll.u32 %s157, 4
          %s167 = int_to_ptr.vmem [resolvable:$true] %s166
          %172 = dma.hbm_to_vmem [thread:$0]  %s165, 1024, %s167, %s154, 256, 256, 16
        $region28: #{tpu_custom_call.1} parent=23 // pred_fallthru
          _
      $region24: #{tpu_custom_call.1} parent=5 // pred_fallthru
        _
      %p173 = scmp.le.s32.totalorder 1, %s15
      %p174 = scmp.lt.s32.totalorder %s15, 3
      %p175 = pnand %p173, %p174
      %p176 = pneg %p175
      // Predicated region
      $region29: #{tpu_custom_call.1} parent=5 // pred_check
        _
      $region30: #{tpu_custom_call.1} parent=5 // pred_check_branch
        %178 = sbr.rel (%p175) target = $region32
      $region31: #{tpu_custom_call.1} parent=5 // pred_region
        %s179 = ssub.s32 %s15, 1
        %s180 = sand.u32 %s42, 1
        %s181 = scalar_lea.sflag [#allocation3], %s180
        %s182 = sand.u32 %s42, 1
        %s183 = smul.addr %s182, 64
        %s184 = scalar_lea.vmem [#allocation2], %s183
        // Predicated region
        $region33: #{tpu_custom_call.1} parent=31 // pred_check
          %p185 = pneg %p55
        $region34: #{tpu_custom_call.1} parent=31 // pred_check_branch
          %187 = sbr.rel (%p185) target = $region36
        $region35: #{tpu_custom_call.1} parent=31 // pred_region
          %188 = dma.done %s181, 1024
        $region36: #{tpu_custom_call.1} parent=31 // pred_fallthru
          _
        %s189 = sand.u32 %s42, 1
        %s190 = scalar_lea.sflag [#allocation3], %s189
        %s191 = sand.u32 %s42, 1
        %s192 = smul.addr %s191, 64
        %s193 = scalar_lea.vmem [#allocation2], %s192
        %p194 = pneg %p55
        %p195 = pneg %p52
        %p196 = pneg %p76
        %p197 = pneg %p73
        %p198 = pneg %p97
        %p199 = pneg %p94
        %p200 = pneg %p125
        %p201 = pneg %p122
        %s202 = sand.u32 %s112, 1
        %s203 = scalar_lea.sflag [#allocation4], %s202
        %s204 = sand.u32 %s112, 1
        %s205 = smul.addr %s204, 64
        %s206 = scalar_lea.vmem [#allocation5], %s205
        %s207 = smul.u32 2, %s25
        %s208 = smul.u32 2, %s25
        %v209 = vld [vmem:[%s184] sm:$0xff]
        %v210 = vld [vmem:[%s184 + $0x8] sm:$0xff]
        %v211 = vld [vmem:[%s184 + $0x10] sm:$0xff]
        %v212 = vld [vmem:[%s184 + $0x18] sm:$0xff]
        %v213 = vld [vmem:[%s184 + $0x20] sm:$0xff]
        %v214 = vld [vmem:[%s184 + $0x28] sm:$0xff]
        %v215 = vld [vmem:[%s184 + $0x30] sm:$0xff]
        %v216 = vld [vmem:[%s184 + $0x38] sm:$0xff]
        %v217 = vadd.f32 %v209, %v211
        %v218 = vadd.f32 %v217, %v213
        %v219 = vadd.f32 %v218, %v215
        %v220 = vrot.slane %v219, 4
        %v221 = vadd.f32 %v219, %v220
        %v222 = vrot.slane %v221, 2
        %v223 = vadd.f32 %v221, %v222
        %v224 = vrot.slane %v223, 1
        %v225 = vadd.f32 %v223, %v224
        %v226 = vadd.f32 %v210, %v212
        %v227 = vadd.f32 %v226, %v214
        %v228 = vadd.f32 %v227, %v216
        %v229 = vrot.slane %v228, 4
        %v230 = vadd.f32 %v228, %v229
        %v231 = vrot.slane %v230, 2
        %v232 = vadd.f32 %v230, %v231
        %v233 = vrot.slane %v232, 1
        %v234 = vadd.f32 %v232, %v233
        %v235 = vmul.f32 %v225, 0.03125
        %v236 = vmul.f32 %v234, 0.03125
        %v237 = vmul.f32 %v209, %v209
        %v238 = vmul.f32 %v210, %v210
        %v239 = vmul.f32 %v211, %v211
        %v240 = vmul.f32 %v212, %v212
        %v241 = vmul.f32 %v213, %v213
        %v242 = vmul.f32 %v214, %v214
        %v243 = vmul.f32 %v215, %v215
        %v244 = vmul.f32 %v216, %v216
        %v245 = vadd.f32 %v237, %v239
        %v246 = vadd.f32 %v245, %v241
        %v247 = vadd.f32 %v246, %v243
        %v248 = vrot.slane %v247, 4
        %v249 = vadd.f32 %v247, %v248
        %v250 = vrot.slane %v249, 2
        %v251 = vadd.f32 %v249, %v250
        %v252 = vrot.slane %v251, 1
        %v253 = vadd.f32 %v251, %v252
        %v254 = vadd.f32 %v238, %v240
        %v255 = vadd.f32 %v254, %v242
        %v256 = vadd.f32 %v255, %v244
        %v257 = vrot.slane %v256, 4
        %v258 = vadd.f32 %v256, %v257
        %v259 = vrot.slane %v258, 2
        %v260 = vadd.f32 %v258, %v259
        %v261 = vrot.slane %v260, 1
        %v262 = vadd.f32 %v260, %v261
        %v263 = vmul.f32 %v253, 0.03125
        %v264 = vmul.f32 %v262, 0.03125
        %v265 = vmul.f32 %v235, %v235
        %v266 = vmul.f32 %v236, %v236
        %v267 = vsub.f32 %v263, %v265
        %v268 = vsub.f32 %v264, %v266
        %v269 = vmax.f32 %v267, 0.0
        %v270 = vmax.f32 %v268, 0.0
        %v271 = vadd.f32 %v269, 1e-06
        %v272 = vadd.f32 %v270, 1e-06
        %v273 = vrsqrt.pop %v271
        %v274 = vrsqrt.pop %v272
        %v275 = vld [vmem:[%s1] sm:$0xff]
        %v276 = vld [vmem:[%s1 + $0x8] sm:$0xff]
        %v277 = vld [vmem:[%s1 + $0x10] sm:$0xff]
        %v278 = vld [vmem:[%s1 + $0x18] sm:$0xff]
        %v279 = vld [vmem:[%s2] sm:$0xff]
        %v280 = vld [vmem:[%s2 + $0x8] sm:$0xff]
        %v281 = vld [vmem:[%s2 + $0x10] sm:$0xff]
        %v282 = vld [vmem:[%s2 + $0x18] sm:$0xff]
        %v283 = vsub.f32 %v209, %v235
        %v284 = vsub.f32 %v210, %v236
        %v285 = vsub.f32 %v211, %v235
        %v286 = vsub.f32 %v212, %v236
        %v287 = vsub.f32 %v213, %v235
        %v288 = vsub.f32 %v214, %v236
        %v289 = vsub.f32 %v215, %v235
        %v290 = vsub.f32 %v216, %v236
        %v291 = vmul.f32 %v283, %v273
        %v292 = vmul.f32 %v284, %v274
        %v293 = vmul.f32 %v285, %v273
        %v294 = vmul.f32 %v286, %v274
        %v295 = vmul.f32 %v287, %v273
        %v296 = vmul.f32 %v288, %v274
        %v297 = vmul.f32 %v289, %v273
        %v298 = vmul.f32 %v290, %v274
        %300 = vset.pattern.permute.xlu0 0
        %301 = vperm.xlu0 %300, %v275
        %v302 = vpop.permute.xlu0 %301
        %305 = vset.pattern.permute.xlu0 0
        %306 = vperm.xlu0 %305, %v276
        %v307 = vpop.permute.xlu0 %306
        %310 = vset.pattern.permute.xlu0 0
        %311 = vperm.xlu0 %310, %v277
        %v312 = vpop.permute.xlu0 %311
        %315 = vset.pattern.permute.xlu0 0
        %316 = vperm.xlu0 %315, %v278
        %v317 = vpop.permute.xlu0 %316
        %v319 = vmul.f32 %v291, %v302
        %v320 = vmul.f32 %v292, %v302
        %v321 = vmul.f32 %v293, %v307
        %v322 = vmul.f32 %v294, %v307
        %v323 = vmul.f32 %v295, %v312
        %v324 = vmul.f32 %v296, %v312
        %v325 = vmul.f32 %v297, %v317
        %v326 = vmul.f32 %v298, %v317
        %328 = vset.pattern.permute.xlu0 0
        %329 = vperm.xlu0 %328, %v279
        %v330 = vpop.permute.xlu0 %329
        %333 = vset.pattern.permute.xlu0 0
        %334 = vperm.xlu0 %333, %v280
        %v335 = vpop.permute.xlu0 %334
        %338 = vset.pattern.permute.xlu0 0
        %339 = vperm.xlu0 %338, %v281
        %v340 = vpop.permute.xlu0 %339
        %343 = vset.pattern.permute.xlu0 0
        %344 = vperm.xlu0 %343, %v282
        %v345 = vpop.permute.xlu0 %344
        %v347 = vadd.f32 %v319, %v330
        %v348 = vadd.f32 %v320, %v330
        %v349 = vadd.f32 %v321, %v335
        %v350 = vadd.f32 %v322, %v335
        %v351 = vadd.f32 %v323, %v340
        %v352 = vadd.f32 %v324, %v340
        %v353 = vadd.f32 %v325, %v345
        %v354 = vadd.f32 %v326, %v345
        %355 = vst [vmem:[%s206] sm:$0xff] %v347
        %356 = vst [vmem:[%s206 + $0x8] sm:$0xff] %v348
        %357 = vst [vmem:[%s206 + $0x10] sm:$0xff] %v349
        %358 = vst [vmem:[%s206 + $0x18] sm:$0xff] %v350
        %359 = vst [vmem:[%s206 + $0x20] sm:$0xff] %v351
        %360 = vst [vmem:[%s206 + $0x28] sm:$0xff] %v352
        %361 = vst [vmem:[%s206 + $0x30] sm:$0xff] %v353
        %362 = vst [vmem:[%s206 + $0x38] sm:$0xff] %v354
        %s363 = sand.u32 %s112, 1
        %s364 = scalar_lea.sflag [#allocation4], %s363
        %s365 = sand.u32 %s112, 1
        %s366 = smul.addr %s365, 64
        %s367 = scalar_lea.vmem [#allocation5], %s366
        // Predicated region
        $region37: #{tpu_custom_call.1} parent=31 // pred_check
          %p368 = pneg %p122
        $region38: #{tpu_custom_call.1} parent=31 // pred_check_branch
          %370 = sbr.rel (%p368) target = $region40
        $region39: #{tpu_custom_call.1} parent=31 // pred_region
          %s371 = smul.u32 2, %s25
          %s373 = ssub.s32 1024, 1024
          %374 = vsyncadd %s364, %s373
          %s375 = smul.addr %s24, 8
          %s376 = sadd.s32 %s371, %s375
          %s377 = smul.addr %s376, 128
          %s378 = scalar_lea.hbm %s3, %s377
          %s379 = sshll.u32 %s367, 4
          %s380 = int_to_ptr.vmem [resolvable:$true] %s379
          %385 = dma.vmem_to_hbm [thread:$0]  %s380, 1024, %s378, %s364, 256, 256, 16
        $region40: #{tpu_custom_call.1} parent=31 // pred_fallthru
          _
      $region32: #{tpu_custom_call.1} parent=5 // pred_fallthru
        _
      %p386 = scmp.le.s32.totalorder 2, %s15
      // Predicated region
      $region41: #{tpu_custom_call.1} parent=5 // pred_check
        %p387 = pneg %p386
      $region42: #{tpu_custom_call.1} parent=5 // pred_check_branch
        %389 = sbr.rel (%p387) target = $region44
      $region43: #{tpu_custom_call.1} parent=5 // pred_region
        %s390 = ssub.s32 %s15, 2
        // Predicated region
        $region45: #{tpu_custom_call.1} parent=43 // pred_check
          %p391 = pneg %p128
        $region46: #{tpu_custom_call.1} parent=43 // pred_check_branch
          %393 = sbr.rel (%p391) target = $region48
        $region47: #{tpu_custom_call.1} parent=43 // pred_region
          %s394 = sand.u32 %s113, 1
          %s395 = scalar_lea.sflag [#allocation4], %s394
          %s396 = sand.u32 %s113, 1
          %s397 = smul.addr %s396, 64
          %s398 = scalar_lea.vmem [#allocation5], %s397
          %399 = dma.done %s395, 1024
        $region48: #{tpu_custom_call.1} parent=43 // pred_fallthru
          _
      $region44: #{tpu_custom_call.1} parent=5 // pred_fallthru
        _
    $region6: #{tpu_custom_call.1} parent=1 // loop_footer
      %s19 = sadd.s32 1, %s15
    $region7: #{tpu_custom_call.1} parent=1 // loop_footer_branch
      %14 = sbr.rel target = $region3
    $region8: #{tpu_custom_call.1} parent=1 // loop_exit
      _
    %400 = vsyncpa [#allocation3], 1
    %s401 = scalar_lea.sflag [#allocation3], 1
    %402 = vsyncpa %s401, 1
    %403 = vsyncpa [#allocation4], 1
    %s404 = scalar_lea.sflag [#allocation4], 1
    %405 = vsyncpa %s404, 1

</llo_original>
